<compile_context>
chip_gen: v7x
topology: tpu7x:2x2x1
jax: 0.10.0
libtpu: 0.0.40
codegen_flags: <defaults>
</compile_context>

<pallas_src>
import functools
import math

import jax
import jax.numpy as jnp
from jax.experimental import pallas as pl
from jax.experimental.pallas import tpu as pltpu

_NEG_INF = float("-inf")


def _round_up(v: int, m: int) -> int:
    return ((v + m - 1) // m) * m


# ----------------------------------------------------------------------------
# Fused detector kernel. One grid step = one (image, HW-tile) pair.
#   x_ref  : (1, C, T)     bf16 image tile, channel-planar (T lanes)
#   ws_ref : (C, D, 1)     f32  folded stem weight (normalization pre-folded)
#   bs_ref : (D, 1)        f32  folded stem bias
#   qe_ref : (Q, D)        bf16 query embeddings, pre-scaled by 1/sqrt(D)
#   wh_ref : (D, NOUT)     bf16 fused [cls | reg | zero-pad] head weight
#   bh_ref : (1, NOUT)     f32  fused head bias
#   out_ref: (1, Q, NOUT)  f32  sigmoid([cls logits | reg raw | pad])
#   m/l/acc: online-softmax state, (Q,1)/(Q,1)/(Q,D) f32 VMEM scratch
# ----------------------------------------------------------------------------
def _fused_detector_kernel(x_ref, ws_ref, bs_ref, qe_ref, wh_ref, bh_ref,
                           out_ref, m_ref, l_ref, acc_ref,
                           *, num_channels, hw_tile, hw_valid, needs_mask):
    h = pl.program_id(1)

    # ---- init per-image online-softmax state --------------------------------
    @pl.when(h == 0)
    def _():
        m_ref[...] = jnp.full(m_ref.shape, _NEG_INF, m_ref.dtype)
        l_ref[...] = jnp.zeros(l_ref.shape, l_ref.dtype)
        acc_ref[...] = jnp.zeros(acc_ref.shape, acc_ref.dtype)

    # ---- stem: folded (x-mean)/std + 1x1 projection + ReLU ------------------
    # x stays bf16; cast one (1, T) channel row at a time (no (C, T) f32 temp).
    # C is static & tiny -> fully unrolled VPU FMAs (filler under the MXU).
    x_tile = x_ref[0]                                              # (C, T) bf16
    feat = None
    for c in range(num_channels):
        contrib = ws_ref[c] * x_tile[c:c + 1, :].astype(jnp.float32)  # (D,1)*(1,T)
        feat = contrib if feat is None else feat + contrib
    # bf16 feature tile: halves VMEM residency and feeds the MXU at native rate.
    feat = jnp.maximum(feat + bs_ref[...], 0.0).astype(jnp.bfloat16)  # (D, T)

    # ---- attention scores for this HW tile (bf16 MXU, f32 accumulate) -------
    s = jnp.dot(qe_ref[...], feat, preferred_element_type=jnp.float32)  # (Q, T)
    if needs_mask:  # only the last tile of a non-128-aligned HW has padding
        pos = h * hw_tile + jax.lax.broadcasted_iota(jnp.int32, (1, hw_tile), 1)
        s = jnp.where(pos < hw_valid, s, _NEG_INF)

    # ---- online (flash-style) softmax + pooled-feature accumulation ---------
    m_prev = m_ref[...]                                             # (Q, 1)
    m_new = jnp.maximum(m_prev, s.max(axis=-1, keepdims=True))
    alpha = jnp.exp(m_prev - m_new)
    p = jnp.exp(s - m_new)                                          # (Q, T) f32
    l_ref[...] = alpha * l_ref[...] + p.sum(axis=-1, keepdims=True)
    # contract the HW axis of both operands (no transpose/relayout of feat)
    pooled = jax.lax.dot_general(p.astype(jnp.bfloat16), feat,
                                 (((1,), (1,)), ((), ())),
                                 preferred_element_type=jnp.float32)  # (Q, D)
    acc_ref[...] = alpha * acc_ref[...] + pooled
    m_ref[...] = m_new

    # ---- finalize: fused cls/reg head + sigmoid, lane-dense 128-wide store --
    @pl.when(h == pl.num_programs(1) - 1)
    def _():
        qf = (acc_ref[...] / l_ref[...]).astype(jnp.bfloat16)        # (Q, D)
        logits = jnp.dot(qf, wh_ref[...],
                         preferred_element_type=jnp.float32) + bh_ref[...]
        out_ref[0] = jax.nn.sigmoid(logits)


def fused_detector(x_planar, ws, bs, qe, wh, bh, *, hw_valid, hw_tile):
    n, c, hw_pad = x_planar.shape
    assert hw_pad % hw_tile == 0 and hw_tile % 128 == 0
    q, d = qe.shape
    nout = wh.shape[1]
    n_hw = hw_pad // hw_tile
    needs_mask = hw_pad != hw_valid

    kernel = functools.partial(_fused_detector_kernel, num_channels=c,
                               hw_tile=hw_tile, hw_valid=hw_valid,
                               needs_mask=needs_mask)

    flops = int(n * hw_pad * (2 * c * d + 4 * q * d) + n * 2 * q * d * nout)
    transcendentals = int(n * (2 * q * hw_pad + q * nout))
    bytes_accessed = int(n * c * hw_pad * 2                       # bf16 image
                         + (c * d + d) * 4 + (q * d + d * nout) * 2 + nout * 4
                         + n * q * nout * 4)                      # f32 output

    return pl.pallas_call(
        kernel,
        out_shape=jax.ShapeDtypeStruct((n, q, nout), jnp.float32),
        grid_spec=pltpu.PrefetchScalarGridSpec(
            num_scalar_prefetch=0,
            grid=(n, n_hw),                   # batch (parallel), HW stream (last)
            in_specs=[
                pl.BlockSpec((1, c, hw_tile), lambda b, h: (b, 0, h)),  # streamed image
                pl.BlockSpec((c, d, 1), lambda b, h: (0, 0, 0)),        # resident weights
                pl.BlockSpec((d, 1), lambda b, h: (0, 0)),
                pl.BlockSpec((q, d), lambda b, h: (0, 0)),
                pl.BlockSpec((d, nout), lambda b, h: (0, 0)),
                pl.BlockSpec((1, nout), lambda b, h: (0, 0)),
            ],
            out_specs=pl.BlockSpec((1, q, nout), lambda b, h: (b, 0, 0)),
            scratch_shapes=[
                pltpu.VMEM((q, 1), jnp.float32),   # running max  m
                pltpu.VMEM((q, 1), jnp.float32),   # running sum  l
                pltpu.VMEM((q, d), jnp.float32),   # running pooled features
            ],
        ),
        compiler_params=pltpu.CompilerParams(
            dimension_semantics=("parallel", "arbitrary"),   # v7x: TCs own whole images
            vmem_limit_bytes=32 * 1024 * 1024,
        ),
        cost_estimate=pl.CostEstimate(flops=flops,
                                      transcendentals=transcendentals,
                                      bytes_accessed=bytes_accessed),
    )(x_planar, ws, bs, qe, wh, bh)


# ----------------------------------------------------------------------------
# Model wrapper: parameter setup (with offline folding) + glue.
# ----------------------------------------------------------------------------
class MMDetPallasModel:
    def __init__(self, *, in_channels=3, hidden=32, num_queries=8,
                 num_classes=4, hw_tile=2048, key=jax.random.PRNGKey(0)):
        assert hw_tile % 128 == 0
        ks = jax.random.split(key, 4)
        self.in_channels = in_channels
        self.hidden = hidden
        self.num_queries = num_queries
        self.num_classes = num_classes
        self.hw_tile = hw_tile

        # mmdet DetDataPreprocessor defaults (per-channel mean/std, RGB).
        pix_mean = jnp.array([123.675, 116.28, 103.53], jnp.float32)[:in_channels]
        pix_std = jnp.array([58.395, 57.12, 57.375], jnp.float32)[:in_channels]

        # Backbone stem (1x1 channel projection) — deterministic init.
        bound = math.sqrt(6.0 / in_channels)
        w_stem = jax.random.uniform(ks[0], (in_channels, hidden),
                                    jnp.float32, -bound, bound)
        b_stem = jnp.zeros((hidden,), jnp.float32)

        # Fold (x - mean)/std into the stem:  relu(x @ W' + b')
        #   W' = W / std[:,None],  b' = b - (mean/std) @ W
        inv_std = 1.0 / pix_std
        w_eff = w_stem * inv_std[:, None]                          # (C, D)
        b_eff = b_stem - (pix_mean * inv_std) @ w_stem             # (D,)
        self.w_stem_planar = w_eff[:, :, None]                     # (C, D, 1) f32
        self.b_stem_planar = b_eff[:, None]                        # (D, 1)    f32

        # Learned query embeddings, pre-scaled by 1/sqrt(D); bf16 MXU operand.
        qe = jax.random.normal(ks[1], (num_queries, hidden), jnp.float32) * 0.02
        self.query_embed = (qe / math.sqrt(hidden)).astype(jnp.bfloat16)

        # cls_branch: kaiming-uniform weight, constant bias -4.59511985013459
        # (matches the DINOHead re-init in _prepare_mm_model). reg_branch plain.
        cls_bound = math.sqrt(6.0 / hidden)
        w_cls = jax.random.uniform(ks[2], (hidden, num_classes),
                                   jnp.float32, -cls_bound, cls_bound)
        b_cls = jnp.full((num_classes,), -4.59511985013459, jnp.float32)
        reg_bound = math.sqrt(6.0 / hidden)
        w_reg = jax.random.uniform(ks[3], (hidden, 4),
                                   jnp.float32, -reg_bound, reg_bound)
        b_reg = jnp.zeros((4,), jnp.float32)

        # Concatenate cls+reg heads and zero-pad output columns to a multiple
        # of 128 so the kernel's output store is lane-dense (unmasked vst).
        nraw = num_classes + 4
        nout = max(128, _round_up(nraw, 128))
        w_head = jnp.zeros((hidden, nout), jnp.float32)
        w_head = w_head.at[:, :num_classes].set(w_cls)
        w_head = w_head.at[:, num_classes:nraw].set(w_reg)
        b_head = jnp.zeros((1, nout), jnp.float32)
        b_head = b_head.at[0, :num_classes].set(b_cls)
        b_head = b_head.at[0, num_classes:nraw].set(b_reg)
        self.w_head = w_head.astype(jnp.bfloat16)                  # (D, NOUT) bf16
        self.b_head = b_head                                       # (1, NOUT) f32
        self.nout = nout

    def forward(self, images_nchw, image_sizes):
        # TODO(synk): config-file parsing, MODELS.build, checkpoint loading,
        # mmcv Compose pipelines and the recorder / IoU / confusion-mask hooks
        # have no tensor semantics and are not translated.
        n, c, h, w = images_nchw.shape
        hw = h * w
        # NCHW -> (N, C, H*W) is a free reshape; keep the image narrow (bf16)
        # so the streamed input DMA reads 2 bytes/px instead of 4.
        x_planar = images_nchw.reshape(n, c, hw).astype(jnp.bfloat16)

        tile = min(self.hw_tile, _round_up(hw, 128))
        n_hw = -(-hw // tile)
        hw_pad = n_hw * tile
        if hw_pad != hw:
            x_planar = jnp.pad(x_planar, ((0, 0), (0, 0), (0, hw_pad - hw)))

        out = fused_detector(x_planar, self.w_stem_planar, self.b_stem_planar,
                             self.query_embed, self.w_head, self.b_head,
                             hw_valid=hw, hw_tile=tile)

        ncls = self.num_classes
        scores_all = out[:, :, :ncls]                      # (N, Q, num_classes)
        boxes_cxcywh = out[:, :, ncls:ncls + 4]            # (N, Q, 4) normalized

        # Batched postprocess (one jnp computation for the whole batch):
        # per-query best class/score, cxcywh(normalized) -> xyxy in pixels.
        labels = jnp.argmax(scores_all, axis=-1)           # (N, Q)
        scores = jnp.max(scores_all, axis=-1)              # (N, Q)
        bxind = jnp.broadcast_to(jnp.arange(n, dtype=jnp.int32)[:, None],
                                 (n, self.num_queries))    # per-box batch index
        sizes = jnp.asarray(image_sizes, jnp.float32)      # (N, 2) = (h, w)
        ih = sizes[:, 0:1]
        iw = sizes[:, 1:2]
        cx, cy, bw, bh = (boxes_cxcywh[..., 0], boxes_cxcywh[..., 1],
                          boxes_cxcywh[..., 2], boxes_cxcywh[..., 3])
        x1 = (cx - 0.5 * bw) * iw
        y1 = (cy - 0.5 * bh) * ih
        x2 = (cx + 0.5 * bw) * iw
        y2 = (cy + 0.5 * bh) * ih
        bboxes = jnp.stack([x1, y1, x2, y2], axis=-1)      # (N, Q, 4)

        outputs = []
        for i in range(n):   # pure views/slices, no per-image device compute
            outputs.append({
                "unprocessed_boxes": bboxes[i],
                "unprocessed_bxind": bxind[i],
                "unprocessed_clsid": labels[i],
                "unprocessed_score": scores[i],
            })
        return outputs


if __name__ == "__main__":
    key = jax.random.PRNGKey(0)
    N, C, H, W = 2, 3, 16, 16
    images = jax.random.uniform(key, (N, C, H, W), jnp.float32) * 255.0

    # hw_tile=128 at this toy size exercises the multi-tile online-softmax
    # streaming path (grid = (2 images, 2 HW tiles)); production default 2048.
    model = MMDetPallasModel(in_channels=C, hidden=32, num_queries=8,
                             num_classes=4, hw_tile=128,
                             key=jax.random.PRNGKey(0))
    outs = model.forward(images, image_sizes=[(H, W)] * N)
    jax.block_until_ready([o["unprocessed_boxes"] for o in outs]
                          + [o["unprocessed_score"] for o in outs])
    print("KERNEL_OK")
</pallas_src>

<mosaic_0001>
module attributes {stable_mosaic.version = 11 : i64} {
  func.func @_fused_detector_kernel(%arg0: i32, %arg1: i32, %arg2: memref<1x3x128xbf16, #tpu.memory_space<vmem>>, %arg3: memref<3x32x1xf32, #tpu.memory_space<vmem>>, %arg4: memref<32x1xf32, #tpu.memory_space<vmem>>, %arg5: memref<8x32xbf16, #tpu.memory_space<vmem>>, %arg6: memref<32x128xbf16, #tpu.memory_space<vmem>>, %arg7: memref<1x128xf32, #tpu.memory_space<vmem>>, %arg8: memref<1x8x128xf32, #tpu.memory_space<vmem>>, %arg9: memref<8x1xf32, #tpu.memory_space<vmem>>, %arg10: memref<8x1xf32, #tpu.memory_space<vmem>>, %arg11: memref<8x32xf32, #tpu.memory_space<vmem>>) attributes {dimension_semantics = [#tpu.dimension_semantics<parallel>, #tpu.dimension_semantics<arbitrary>], iteration_bounds = array<i64: 2, 2>, scalar_prefetch = 0 : i64, scratch_operands = 3 : i64, tpu.core_type = #tpu.core_type<tc>, window_params = [{transform_indices = @transform_0, window_bounds = array<i64: 1, 3, 128>}, {pipeline_mode = #tpu.pipeline_mode<synchronous>, transform_indices = @transform_1, window_bounds = array<i64: 3, 32, 1>}, {pipeline_mode = #tpu.pipeline_mode<synchronous>, transform_indices = @transform_2, window_bounds = array<i64: 32, 1>}, {pipeline_mode = #tpu.pipeline_mode<synchronous>, transform_indices = @transform_3, window_bounds = array<i64: 8, 32>}, {pipeline_mode = #tpu.pipeline_mode<synchronous>, transform_indices = @transform_4, window_bounds = array<i64: 32, 128>}, {pipeline_mode = #tpu.pipeline_mode<synchronous>, transform_indices = @transform_5, window_bounds = array<i64: 1, 128>}, {transform_indices = @transform_6, window_bounds = array<i64: 1, 8, 128>}]} {
    %c0_i32 = arith.constant 0 : i32
    %0 = arith.cmpi eq, %arg1, %c0_i32 : i32
    %1 = arith.extui %0 : i1 to i32
    %c0_i32_0 = arith.constant 0 : i32
    %2 = arith.cmpi ne, %1, %c0_i32_0 : i32
    scf.if %2 {
      %cst_31 = arith.constant 0xFF800000 : f32
      %62 = vector.broadcast %cst_31 : f32 to vector<8x1xf32>
      %c0_32 = arith.constant 0 : index
      %c0_33 = arith.constant 0 : index
      %63 = vector.load %arg9[%c0_32, %c0_33] : memref<8x1xf32, #tpu.memory_space<vmem>>, vector<8x1xf32>
      tpu.vector_store %arg9[%c0_32, %c0_33], %62 {strides = array<i32>} : memref<8x1xf32, #tpu.memory_space<vmem>>, vector<8x1xf32>,
      %cst_34 = arith.constant 0.000000e+00 : f32
      %64 = vector.broadcast %cst_34 : f32 to vector<8x1xf32>
      %c0_35 = arith.constant 0 : index
      %c0_36 = arith.constant 0 : index
      %65 = vector.load %arg10[%c0_35, %c0_36] : memref<8x1xf32, #tpu.memory_space<vmem>>, vector<8x1xf32>
      tpu.vector_store %arg10[%c0_35, %c0_36], %64 {strides = array<i32>} : memref<8x1xf32, #tpu.memory_space<vmem>>, vector<8x1xf32>,
      %cst_37 = arith.constant 0.000000e+00 : f32
      %66 = vector.broadcast %cst_37 : f32 to vector<8x32xf32>
      %c0_38 = arith.constant 0 : index
      %c0_39 = arith.constant 0 : index
      %67 = vector.load %arg11[%c0_38, %c0_39] : memref<8x32xf32, #tpu.memory_space<vmem>>, vector<8x32xf32>
      tpu.vector_store %arg11[%c0_38, %c0_39], %66 {strides = array<i32>} : memref<8x32xf32, #tpu.memory_space<vmem>>, vector<8x32xf32>,
    } else {
    }
    %c0 = arith.constant 0 : index
    %c0_1 = arith.constant 0 : index
    %c0_2 = arith.constant 0 : index
    %3 = vector.load %arg2[%c0, %c0_1, %c0_2] : memref<1x3x128xbf16, #tpu.memory_space<vmem>>, vector<1x3x128xbf16>
    %4 = vector.shape_cast %3 : vector<1x3x128xbf16> to vector<3x128xbf16>
    %c0_3 = arith.constant 0 : index
    %c0_4 = arith.constant 0 : index
    %c0_5 = arith.constant 0 : index
    %5 = vector.load %arg3[%c0_3, %c0_4, %c0_5] : memref<3x32x1xf32, #tpu.memory_space<vmem>>, vector<1x32x1xf32>
    %6 = vector.shape_cast %5 : vector<1x32x1xf32> to vector<32x1xf32>
    %7 = vector.extract_strided_slice %4 {offsets = [0, 0], sizes = [1, 128], strides = [1, 1]} : vector<3x128xbf16> to vector<1x128xbf16>
    %8 = arith.extf %7 : vector<1x128xbf16> to vector<1x128xf32>
    %9 = vector.broadcast %6 : vector<32x1xf32> to vector<32x128xf32>
    %10 = vector.broadcast %8 : vector<1x128xf32> to vector<32x128xf32>
    %11 = arith.mulf %9, %10 : vector<32x128xf32>
    %c1 = arith.constant 1 : index
    %c0_6 = arith.constant 0 : index
    %c0_7 = arith.constant 0 : index
    %12 = vector.load %arg3[%c1, %c0_6, %c0_7] : memref<3x32x1xf32, #tpu.memory_space<vmem>>, vector<1x32x1xf32>
    %13 = vector.shape_cast %12 : vector<1x32x1xf32> to vector<32x1xf32>
    %14 = vector.extract_strided_slice %4 {offsets = [1, 0], sizes = [1, 128], strides = [1, 1]} : vector<3x128xbf16> to vector<1x128xbf16>
    %15 = arith.extf %14 : vector<1x128xbf16> to vector<1x128xf32>
    %16 = vector.broadcast %13 : vector<32x1xf32> to vector<32x128xf32>
    %17 = vector.broadcast %15 : vector<1x128xf32> to vector<32x128xf32>
    %18 = arith.mulf %16, %17 : vector<32x128xf32>
    %19 = arith.addf %11, %18 : vector<32x128xf32>
    %c2 = arith.constant 2 : index
    %c0_8 = arith.constant 0 : index
    %c0_9 = arith.constant 0 : index
    %20 = vector.load %arg3[%c2, %c0_8, %c0_9] : memref<3x32x1xf32, #tpu.memory_space<vmem>>, vector<1x32x1xf32>
    %21 = vector.shape_cast %20 : vector<1x32x1xf32> to vector<32x1xf32>
    %22 = vector.extract_strided_slice %4 {offsets = [2, 0], sizes = [1, 128], strides = [1, 1]} : vector<3x128xbf16> to vector<1x128xbf16>
    %23 = arith.extf %22 : vector<1x128xbf16> to vector<1x128xf32>
    %24 = vector.broadcast %21 : vector<32x1xf32> to vector<32x128xf32>
    %25 = vector.broadcast %23 : vector<1x128xf32> to vector<32x128xf32>
    %26 = arith.mulf %24, %25 : vector<32x128xf32>
    %27 = arith.addf %19, %26 : vector<32x128xf32>
    %c0_10 = arith.constant 0 : index
    %c0_11 = arith.constant 0 : index
    %28 = vector.load %arg4[%c0_10, %c0_11] : memref<32x1xf32, #tpu.memory_space<vmem>>, vector<32x1xf32>
    %29 = vector.broadcast %28 : vector<32x1xf32> to vector<32x128xf32>
    %30 = arith.addf %27, %29 : vector<32x128xf32>
    %cst = arith.constant 0.000000e+00 : f32
    %31 = vector.broadcast %cst : f32 to vector<32x128xf32>
    %32 = arith.maximumf %30, %31 : vector<32x128xf32>
    %33 = arith.truncf %32 : vector<32x128xf32> to vector<32x128xbf16>
    %c0_12 = arith.constant 0 : index
    %c0_13 = arith.constant 0 : index
    %34 = vector.load %arg5[%c0_12, %c0_13] : memref<8x32xbf16, #tpu.memory_space<vmem>>, vector<8x32xbf16>
    %cst_14 = arith.constant dense<0.000000e+00> : vector<8x128xf32>
    %35 = tpu.matmul %34, %33, %cst_14 {dimension_numbers = #tpu.dot_dimension_numbers<[1], [0], [0], [1], [0, 0, 1, 1], [], []>} : vector<8x32xbf16>, vector<32x128xbf16>, vector<8x128xf32> -> vector<8x128xf32>
    %c0_15 = arith.constant 0 : index
    %c0_16 = arith.constant 0 : index
    %36 = vector.load %arg9[%c0_15, %c0_16] : memref<8x1xf32, #tpu.memory_space<vmem>>, vector<8x1xf32>
    %cst_17 = arith.constant dense<0xFF800000> : vector<8xf32>
    %37 = vector.multi_reduction <maximumf>, %35, %cst_17 [1] : vector<8x128xf32> to vector<8xf32>
    %38 = vector.shape_cast %37 : vector<8xf32> to vector<8x1xf32>
    %39 = arith.maximumf %36, %38 : vector<8x1xf32>
    %40 = arith.subf %36, %39 : vector<8x1xf32>
    %41 = math.exp %40 : vector<8x1xf32>
    %42 = vector.broadcast %39 : vector<8x1xf32> to vector<8x128xf32>
    %43 = arith.subf %35, %42 : vector<8x128xf32>
    %44 = math.exp %43 : vector<8x128xf32>
    %c0_18 = arith.constant 0 : index
    %c0_19 = arith.constant 0 : index
    %45 = vector.load %arg10[%c0_18, %c0_19] : memref<8x1xf32, #tpu.memory_space<vmem>>, vector<8x1xf32>
    %46 = arith.mulf %41, %45 : vector<8x1xf32>
    %cst_20 = arith.constant dense<0.000000e+00> : vector<8xf32>
    %47 = vector.multi_reduction <add>, %44, %cst_20 [1] : vector<8x128xf32> to vector<8xf32>
    %48 = vector.shape_cast %47 : vector<8xf32> to vector<8x1xf32>
    %49 = arith.addf %46, %48 : vector<8x1xf32>
    %c0_21 = arith.constant 0 : index
    %c0_22 = arith.constant 0 : index
    %50 = vector.load %arg10[%c0_21, %c0_22] : memref<8x1xf32, #tpu.memory_space<vmem>>, vector<8x1xf32>
    tpu.vector_store %arg10[%c0_21, %c0_22], %49 {strides = array<i32>} : memref<8x1xf32, #tpu.memory_space<vmem>>, vector<8x1xf32>,
    %51 = arith.truncf %44 : vector<8x128xf32> to vector<8x128xbf16>
    %cst_23 = arith.constant dense<0.000000e+00> : vector<8x32xf32>
    %52 = tpu.matmul %51, %33, %cst_23 {dimension_numbers = #tpu.dot_dimension_numbers<[1], [1], [0], [0], [0, 0, 1, 0], [], []>} : vector<8x128xbf16>, vector<32x128xbf16>, vector<8x32xf32> -> vector<8x32xf32>
    %c0_24 = arith.constant 0 : index
    %c0_25 = arith.constant 0 : index
    %53 = vector.load %arg11[%c0_24, %c0_25] : memref<8x32xf32, #tpu.memory_space<vmem>>, vector<8x32xf32>
    %54 = vector.broadcast %41 : vector<8x1xf32> to vector<8x32xf32>
    %55 = arith.mulf %54, %53 : vector<8x32xf32>
    %56 = arith.addf %55, %52 : vector<8x32xf32>
    %c0_26 = arith.constant 0 : index
    %c0_27 = arith.constant 0 : index
    %57 = vector.load %arg11[%c0_26, %c0_27] : memref<8x32xf32, #tpu.memory_space<vmem>>, vector<8x32xf32>
    tpu.vector_store %arg11[%c0_26, %c0_27], %56 {strides = array<i32>} : memref<8x32xf32, #tpu.memory_space<vmem>>, vector<8x32xf32>,
    %c0_28 = arith.constant 0 : index
    %c0_29 = arith.constant 0 : index
    %58 = vector.load %arg9[%c0_28, %c0_29] : memref<8x1xf32, #tpu.memory_space<vmem>>, vector<8x1xf32>
    tpu.vector_store %arg9[%c0_28, %c0_29], %39 {strides = array<i32>} : memref<8x1xf32, #tpu.memory_space<vmem>>, vector<8x1xf32>,
    %c1_i32 = arith.constant 1 : i32
    %59 = arith.cmpi eq, %arg1, %c1_i32 : i32
    %60 = arith.extui %59 : i1 to i32
    %c0_i32_30 = arith.constant 0 : i32
    %61 = arith.cmpi ne, %60, %c0_i32_30 : i32
    scf.if %61 {
      %c0_31 = arith.constant 0 : index
      %c0_32 = arith.constant 0 : index
      %62 = vector.load %arg11[%c0_31, %c0_32] : memref<8x32xf32, #tpu.memory_space<vmem>>, vector<8x32xf32>
      %c0_33 = arith.constant 0 : index
      %c0_34 = arith.constant 0 : index
      %63 = vector.load %arg10[%c0_33, %c0_34] : memref<8x1xf32, #tpu.memory_space<vmem>>, vector<8x1xf32>
      %64 = vector.broadcast %63 : vector<8x1xf32> to vector<8x32xf32>
      %65 = arith.divf %62, %64 : vector<8x32xf32>
      %66 = arith.truncf %65 : vector<8x32xf32> to vector<8x32xbf16>
      %c0_35 = arith.constant 0 : index
      %c0_36 = arith.constant 0 : index
      %67 = vector.load %arg6[%c0_35, %c0_36] : memref<32x128xbf16, #tpu.memory_space<vmem>>, vector<32x128xbf16>
      %cst_37 = arith.constant dense<0.000000e+00> : vector<8x128xf32>
      %68 = tpu.matmul %66, %67, %cst_37 {dimension_numbers = #tpu.dot_dimension_numbers<[1], [0], [0], [1], [0, 0, 1, 1], [], []>} : vector<8x32xbf16>, vector<32x128xbf16>, vector<8x128xf32> -> vector<8x128xf32>
      %c0_38 = arith.constant 0 : index
      %c0_39 = arith.constant 0 : index
      %69 = vector.load %arg7[%c0_38, %c0_39] : memref<1x128xf32, #tpu.memory_space<vmem>>, vector<1x128xf32>
      %70 = vector.broadcast %69 : vector<1x128xf32> to vector<8x128xf32>
      %71 = arith.addf %68, %70 : vector<8x128xf32>
      %72 = arith.negf %71 : vector<8x128xf32>
      %73 = math.exp %72 : vector<8x128xf32>
      %cst_40 = arith.constant 1.000000e+00 : f32
      %74 = vector.broadcast %cst_40 : f32 to vector<8x128xf32>
      %75 = arith.addf %74, %73 : vector<8x128xf32>
      %76 = arith.divf %74, %75 : vector<8x128xf32>
      %c0_41 = arith.constant 0 : index
      %c0_42 = arith.constant 0 : index
      %c0_43 = arith.constant 0 : index
      %77 = vector.load %arg8[%c0_41, %c0_42, %c0_43] : memref<1x8x128xf32, #tpu.memory_space<vmem>>, vector<1x8x128xf32>
      %78 = vector.shape_cast %77 : vector<1x8x128xf32> to vector<8x128xf32>
      %79 = vector.shape_cast %76 : vector<8x128xf32> to vector<1x8x128xf32>
      tpu.vector_store %arg8[%c0_41, %c0_42, %c0_43], %79 {strides = array<i32>} : memref<1x8x128xf32, #tpu.memory_space<vmem>>, vector<1x8x128xf32>,
    } else {
    }
    return
  }
  func.func @transform_0(%arg0: i32, %arg1: i32) -> (i32, i32, i32) {
    %c0_i32 = arith.constant 0 : i32
    %c0_i32_0 = arith.constant 0 : i32
    return %arg0, %c0_i32, %arg1 : i32, i32, i32
  }
  func.func @transform_1(%arg0: i32, %arg1: i32) -> (i32, i32, i32) {
    %c0_i32 = arith.constant 0 : i32
    %c0_i32_0 = arith.constant 0 : i32
    %c0_i32_1 = arith.constant 0 : i32
    %c0_i32_2 = arith.constant 0 : i32
    return %c0_i32, %c0_i32_0, %c0_i32_1 : i32, i32, i32
  }
  func.func @transform_2(%arg0: i32, %arg1: i32) -> (i32, i32) {
    %c0_i32 = arith.constant 0 : i32
    %c0_i32_0 = arith.constant 0 : i32
    %c0_i32_1 = arith.constant 0 : i32
    return %c0_i32, %c0_i32_0 : i32, i32
  }
  func.func @transform_3(%arg0: i32, %arg1: i32) -> (i32, i32) {
    %c0_i32 = arith.constant 0 : i32
    %c0_i32_0 = arith.constant 0 : i32
    %c0_i32_1 = arith.constant 0 : i32
    return %c0_i32, %c0_i32_0 : i32, i32
  }
  func.func @transform_4(%arg0: i32, %arg1: i32) -> (i32, i32) {
    %c0_i32 = arith.constant 0 : i32
    %c0_i32_0 = arith.constant 0 : i32
    %c0_i32_1 = arith.constant 0 : i32
    return %c0_i32, %c0_i32_0 : i32, i32
  }
  func.func @transform_5(%arg0: i32, %arg1: i32) -> (i32, i32) {
    %c0_i32 = arith.constant 0 : i32
    %c0_i32_0 = arith.constant 0 : i32
    %c0_i32_1 = arith.constant 0 : i32
    return %c0_i32, %c0_i32_0 : i32, i32
  }
  func.func @transform_6(%arg0: i32, %arg1: i32) -> (i32, i32, i32) {
    %c0_i32 = arith.constant 0 : i32
    %c0_i32_0 = arith.constant 0 : i32
    %c0_i32_1 = arith.constant 0 : i32
    return %arg0, %c0_i32, %c0_i32_0 : i32, i32, i32
  }
}

</mosaic_0001>

<llo_original>
// kernel: tpu_custom_call.1
$region0: #{tpu_custom_call.1}
  #allocation0 [shape = 'u32[]', space=smem, size = 0x4, offset = 0x4, fixed_abs, tag = 'smem constant byte address 0x4 - core index']
  #allocation1 [shape = 'u32[144,128]{1,0:T(1,128)}', space=vmem, size = 0x12000, scoped, tag = 'internal scratch']
  #allocation2 [shape = 'f32[8,1]{1,0:T(8,128)}', space=vmem, size = 0x1000, scoped, tag = 'scratch operand']
  #allocation3 [shape = 'f32[8,1]{1,0:T(8,128)}', space=vmem, size = 0x1000, scoped, tag = 'scratch operand']
  #allocation4 [shape = 'f32[8,32]{1,0:T(8,128)}', space=vmem, size = 0x1000, scoped, tag = 'scratch operand']
  %s0 = inlined_call_operand.vmem [shape: bf16[2,3,256], index: 0, kind: input, shape index: {}]
  %s1 = inlined_call_operand.vmem [shape: f32[3,32,1], index: 1, kind: input, shape index: {}]
  %s2 = inlined_call_operand.vmem [shape: f32[32,1], index: 2, kind: input, shape index: {}]
  %s3 = inlined_call_operand.vmem [shape: bf16[8,32], index: 3, kind: input, shape index: {}]
  %s4 = inlined_call_operand.vmem [shape: bf16[32,128], index: 4, kind: input, shape index: {}]
  %s5 = inlined_call_operand.vmem [shape: f32[1,128], index: 5, kind: input, shape index: {}]
  %s6 = inlined_call_operand.hbm [shape: f32[2,8,128], index: 6, kind: output, shape index: {}]
  %s7 = sld [smem:[#allocation0]]
  $region65: #{tpu_custom_call.1} parent=0
    _
  %s9 = ssub.s32 1, %s7
  %s10 = scalar_select 0, %s9, %s7
  $region1: #{tpu_custom_call.1} parent=0
    #allocation5 [shape = 'u8[8192]{0}', space=vmem, size = 0x2000, scoped, tag = 'output window, operand 0']
    #allocation6 [shape = 's32[2]{0}', space=sflag, size = 0x8, scoped, tag = 'scoped memory for tpu_custom_call.1']
    %11 = vsyncpa [#allocation6], 0
    %s12 = scalar_lea.sflag [#allocation6], 1
    %13 = vsyncpa %s12, 0
    loop: start=0, step=1, limit=6
    $region2: #{tpu_custom_call.1} parent=1 // loop_pre_header
      _
    $region3: #{tpu_custom_call.1} parent=1 // loop_header
      %s15 = sphi 0, %s19
      %p16 = scmp.ge.s32.totalorder %s15, 6
      %s22 = sphi 0, %s34
      %s23 = sphi 0, %s30
      %s24 = sphi 0, %s22
      %s25 = sphi 0, %s23
      %s26 = sphi 0, %s24
      %s27 = sphi 0, %s25
      %s39 = sphi 0, %s41
      %s42 = sphi 0, %s39
      %s43 = sphi 0, %s42
      %s59 = sphi 0, %s43
      %s63 = sphi 0, %s63
      %s65 = sphi 0, %s63
      %s66 = sphi 0, %s65
      %s80 = sphi 0, %s66
      %s84 = sphi 0, %s84
      %s86 = sphi 0, %s84
      %s87 = sphi 0, %s86
      %s101 = sphi 0, %s87
      %s105 = sphi 0, %s105
      %s107 = sphi 0, %s105
      %s108 = sphi 0, %s107
      %s122 = sphi 0, %s108
      %s126 = sphi 0, %s126
      %s128 = sphi 0, %s126
      %s129 = sphi 0, %s128
      %s143 = sphi 0, %s129
      %s147 = sphi 0, %s147
      %s149 = sphi 0, %s147
      %s150 = sphi 0, %s149
      %s164 = sphi 0, %s150
      %s170 = sphi 0, %s172
      %s173 = sphi 0, %s170
      %s174 = sphi 0, %s173
      %s190 = sphi 0, %s174
    $region4: #{tpu_custom_call.1} parent=1 // loop_header_branch
      %18 = sbr.rel (%p16) target = $region8
    $region5: #{tpu_custom_call.1} parent=1 // loop_body
      %s20 = ssub.s32 %s15, 1
      %s21 = ssub.s32 %s15, 2
      %s28 = sadd.s32 1, %s23
      %p29 = scmp.ge.s32.totalorder %s28, 2
      %s30 = scalar_select %p29, 0, %s28
      %s31 = sadd.s32 1, %s22
      %s32 = scalar_select %p29, %s31, %s22
      %p33 = scmp.ge.s32.totalorder %s32, 2
      %s34 = scalar_select %p33, 0, %s32
      %s35 = ssub.s32 %s22, %s34
      %s36 = ssub.s32 %s23, %s30
      %s37 = sor.u32 %s35, %s36
      %p38 = scmp.eq.s32.totalorder %s37, 0
      %s40 = sadd.s32 %s39, 1
      %s41 = scalar_select %p38, %s39, %s40
      %p44 = pneg %p38
      %p45 = scmp.eq.s32.totalorder %s15, 3
      %p46 = por %p44, %p45
      %p47 = scmp.ne.s32.totalorder %s39, %s42
      %p48 = scmp.eq.s32.totalorder %s15, 0
      %p49 = por %p47, %p48
      %p50 = scmp.ne.s32.totalorder %s39, %s42
      %p51 = scmp.eq.s32.totalorder %s20, 3
      %p52 = por %p50, %p51
      %p53 = scmp.ne.s32.totalorder %s42, %s43
      %p54 = scmp.eq.s32.totalorder %s20, 0
      %p55 = por %p53, %p54
      %p56 = scmp.ne.s32.totalorder %s42, %s43
      %p57 = scmp.eq.s32.totalorder %s21, 3
      %p58 = por %p56, %p57
      %p60 = scmp.ne.s32.totalorder %s43, %s59
      %p61 = scmp.eq.s32.totalorder %s21, 0
      %p62 = por %p60, %p61
      %s64 = sadd.s32 %s63, 1
      %p67 = scmp.eq.s32.totalorder %s15, 3
      %p68 = scmp.ne.s32.totalorder %s63, %s65
      %p69 = scmp.eq.s32.totalorder %s15, 0
      %p70 = por %p68, %p69
      %p71 = scmp.ne.s32.totalorder %s63, %s65
      %p72 = scmp.eq.s32.totalorder %s20, 3
      %p73 = por %p71, %p72
      %p74 = scmp.ne.s32.totalorder %s65, %s66
      %p75 = scmp.eq.s32.totalorder %s20, 0
      %p76 = por %p74, %p75
      %p77 = scmp.ne.s32.totalorder %s65, %s66
      %p78 = scmp.eq.s32.totalorder %s21, 3
      %p79 = por %p77, %p78
      %p81 = scmp.ne.s32.totalorder %s66, %s80
      %p82 = scmp.eq.s32.totalorder %s21, 0
      %p83 = por %p81, %p82
      %s85 = sadd.s32 %s84, 1
      %p88 = scmp.eq.s32.totalorder %s15, 3
      %p89 = scmp.ne.s32.totalorder %s84, %s86
      %p90 = scmp.eq.s32.totalorder %s15, 0
      %p91 = por %p89, %p90
      %p92 = scmp.ne.s32.totalorder %s84, %s86
      %p93 = scmp.eq.s32.totalorder %s20, 3
      %p94 = por %p92, %p93
      %p95 = scmp.ne.s32.totalorder %s86, %s87
      %p96 = scmp.eq.s32.totalorder %s20, 0
      %p97 = por %p95, %p96
      %p98 = scmp.ne.s32.totalorder %s86, %s87
      %p99 = scmp.eq.s32.totalorder %s21, 3
      %p100 = por %p98, %p99
      %p102 = scmp.ne.s32.totalorder %s87, %s101
      %p103 = scmp.eq.s32.totalorder %s21, 0
      %p104 = por %p102, %p103
      %s106 = sadd.s32 %s105, 1
      %p109 = scmp.eq.s32.totalorder %s15, 3
      %p110 = scmp.ne.s32.totalorder %s105, %s107
      %p111 = scmp.eq.s32.totalorder %s15, 0
      %p112 = por %p110, %p111
      %p113 = scmp.ne.s32.totalorder %s105, %s107
      %p114 = scmp.eq.s32.totalorder %s20, 3
      %p115 = por %p113, %p114
      %p116 = scmp.ne.s32.totalorder %s107, %s108
      %p117 = scmp.eq.s32.totalorder %s20, 0
      %p118 = por %p116, %p117
      %p119 = scmp.ne.s32.totalorder %s107, %s108
      %p120 = scmp.eq.s32.totalorder %s21, 3
      %p121 = por %p119, %p120
      %p123 = scmp.ne.s32.totalorder %s108, %s122
      %p124 = scmp.eq.s32.totalorder %s21, 0
      %p125 = por %p123, %p124
      %s127 = sadd.s32 %s126, 1
      %p130 = scmp.eq.s32.totalorder %s15, 3
      %p131 = scmp.ne.s32.totalorder %s126, %s128
      %p132 = scmp.eq.s32.totalorder %s15, 0
      %p133 = por %p131, %p132
      %p134 = scmp.ne.s32.totalorder %s126, %s128
      %p135 = scmp.eq.s32.totalorder %s20, 3
      %p136 = por %p134, %p135
      %p137 = scmp.ne.s32.totalorder %s128, %s129
      %p138 = scmp.eq.s32.totalorder %s20, 0
      %p139 = por %p137, %p138
      %p140 = scmp.ne.s32.totalorder %s128, %s129
      %p141 = scmp.eq.s32.totalorder %s21, 3
      %p142 = por %p140, %p141
      %p144 = scmp.ne.s32.totalorder %s129, %s143
      %p145 = scmp.eq.s32.totalorder %s21, 0
      %p146 = por %p144, %p145
      %s148 = sadd.s32 %s147, 1
      %p151 = scmp.eq.s32.totalorder %s15, 3
      %p152 = scmp.ne.s32.totalorder %s147, %s149
      %p153 = scmp.eq.s32.totalorder %s15, 0
      %p154 = por %p152, %p153
      %p155 = scmp.ne.s32.totalorder %s147, %s149
      %p156 = scmp.eq.s32.totalorder %s20, 3
      %p157 = por %p155, %p156
      %p158 = scmp.ne.s32.totalorder %s149, %s150
      %p159 = scmp.eq.s32.totalorder %s20, 0
      %p160 = por %p158, %p159
      %p161 = scmp.ne.s32.totalorder %s149, %s150
      %p162 = scmp.eq.s32.totalorder %s21, 3
      %p163 = por %p161, %p162
      %p165 = scmp.ne.s32.totalorder %s150, %s164
      %p166 = scmp.eq.s32.totalorder %s21, 0
      %p167 = por %p165, %p166
      %s168 = ssub.s32 %s22, %s34
      %p169 = scmp.eq.s32.totalorder %s168, 0
      %s171 = sadd.s32 %s170, 1
      %s172 = scalar_select %p169, %s170, %s171
      %p175 = pneg %p169
      %p176 = scmp.eq.s32.totalorder %s15, 3
      %p177 = por %p175, %p176
      %p178 = scmp.ne.s32.totalorder %s170, %s173
      %p179 = scmp.eq.s32.totalorder %s15, 0
      %p180 = por %p178, %p179
      %p181 = scmp.ne.s32.totalorder %s170, %s173
      %p182 = scmp.eq.s32.totalorder %s20, 3
      %p183 = por %p181, %p182
      %p184 = scmp.ne.s32.totalorder %s173, %s174
      %p185 = scmp.eq.s32.totalorder %s20, 0
      %p186 = por %p184, %p185
      %p187 = scmp.ne.s32.totalorder %s173, %s174
      %p188 = scmp.eq.s32.totalorder %s21, 3
      %p189 = por %p187, %p188
      %p191 = scmp.ne.s32.totalorder %s174, %s190
      %p192 = scmp.eq.s32.totalorder %s21, 0
      %p193 = por %p191, %p192
      %p194 = scmp.le.s32.totalorder 1, %s15
      %p195 = scmp.lt.s32.totalorder %s15, 5
      %p196 = pnand %p194, %p195
      %p197 = pneg %p196
      // Predicated region
      $region9: #{tpu_custom_call.1} parent=5 // pred_check
        _
      $region10: #{tpu_custom_call.1} parent=5 // pred_check_branch
        %199 = sbr.rel (%p196) target = $region12
      $region11: #{tpu_custom_call.1} parent=5 // pred_region
        %s200 = ssub.s32 %s15, 1
        // Predicated region
        $region13: #{tpu_custom_call.1} parent=11 // pred_check
          %p201 = pneg %p76
        $region14: #{tpu_custom_call.1} parent=11 // pred_check_branch
          %203 = sbr.rel (%p201) target = $region16
        $region15: #{tpu_custom_call.1} parent=11 // pred_region
          _
        $region16: #{tpu_custom_call.1} parent=11 // pred_fallthru
          _
        // Predicated region
        $region17: #{tpu_custom_call.1} parent=11 // pred_check
          %p204 = pneg %p97
        $region18: #{tpu_custom_call.1} parent=11 // pred_check_branch
          %206 = sbr.rel (%p204) target = $region20
        $region19: #{tpu_custom_call.1} parent=11 // pred_region
          _
        $region20: #{tpu_custom_call.1} parent=11 // pred_fallthru
          _
        // Predicated region
        $region21: #{tpu_custom_call.1} parent=11 // pred_check
          %p207 = pneg %p118
        $region22: #{tpu_custom_call.1} parent=11 // pred_check_branch
          %209 = sbr.rel (%p207) target = $region24
        $region23: #{tpu_custom_call.1} parent=11 // pred_region
          _
        $region24: #{tpu_custom_call.1} parent=11 // pred_fallthru
          _
        // Predicated region
        $region25: #{tpu_custom_call.1} parent=11 // pred_check
          %p210 = pneg %p139
        $region26: #{tpu_custom_call.1} parent=11 // pred_check_branch
          %212 = sbr.rel (%p210) target = $region28
        $region27: #{tpu_custom_call.1} parent=11 // pred_region
          _
        $region28: #{tpu_custom_call.1} parent=11 // pred_fallthru
          _
        // Predicated region
        $region29: #{tpu_custom_call.1} parent=11 // pred_check
          %p213 = pneg %p160
        $region30: #{tpu_custom_call.1} parent=11 // pred_check_branch
          %215 = sbr.rel (%p213) target = $region32
        $region31: #{tpu_custom_call.1} parent=11 // pred_region
          _
        $region32: #{tpu_custom_call.1} parent=11 // pred_fallthru
          _
      $region12: #{tpu_custom_call.1} parent=5 // pred_fallthru
        _
      %p216 = scmp.lt.s32.totalorder %s15, 4
      // Predicated region
      $region33: #{tpu_custom_call.1} parent=5 // pred_check
        %p217 = pneg %p216
      $region34: #{tpu_custom_call.1} parent=5 // pred_check_branch
        %219 = sbr.rel (%p217) target = $region36
      $region35: #{tpu_custom_call.1} parent=5 // pred_region
        // Predicated region
        $region37: #{tpu_custom_call.1} parent=35 // pred_check
          %p220 = pneg %p49
        $region38: #{tpu_custom_call.1} parent=35 // pred_check_branch
          %222 = sbr.rel (%p220) target = $region40
        $region39: #{tpu_custom_call.1} parent=35 // pred_region
          %p223 = scmp.lt.s32.totalorder %s22, 1
          %s224 = scalar_select %p223, %s22, 1
          %p225 = scmp.lt.s32.totalorder %s23, 1
          %s226 = scalar_select %p225, %s23, 1
          %s227 = smul.addr %s224, 2
          %s228 = sadd.s32 %s226, %s227
          %s229 = smul.addr %s228, 2
          %s230 = scalar_lea.vmem %s0, %s229
        $region40: #{tpu_custom_call.1} parent=35 // pred_fallthru
          _
      $region36: #{tpu_custom_call.1} parent=5 // pred_fallthru
        _
      %p231 = scmp.le.s32.totalorder 1, %s15
      %p232 = scmp.lt.s32.totalorder %s15, 5
      %p233 = pnand %p231, %p232
      %p234 = pneg %p233
      // Predicated region
      $region41: #{tpu_custom_call.1} parent=5 // pred_check
        _
      $region42: #{tpu_custom_call.1} parent=5 // pred_check_branch
        %236 = sbr.rel (%p233) target = $region44
      $region43: #{tpu_custom_call.1} parent=5 // pred_region
        %s237 = ssub.s32 %s15, 1
        %p238 = scmp.lt.s32.totalorder %s24, 1
        %s239 = scalar_select %p238, %s24, 1
        %p240 = scmp.lt.s32.totalorder %s25, 1
        %s241 = scalar_select %p240, %s25, 1
        %s242 = smul.addr %s239, 2
        %s243 = sadd.s32 %s241, %s242
        %s244 = smul.addr %s243, 2
        %s245 = scalar_lea.vmem %s0, %s244
        %p246 = pneg %p55
        %p247 = pneg %p52
        %p248 = pneg %p76
        %p249 = pneg %p73
        %p250 = pneg %p97
        %p251 = pneg %p94
        %p252 = pneg %p118
        %p253 = pneg %p115
        %p254 = pneg %p139
        %p255 = pneg %p136
        %p256 = pneg %p160
        %p257 = pneg %p157
        %p258 = pneg %p186
        %p259 = pneg %p183
        %s260 = sand.u32 %s173, 1
        %s261 = scalar_lea.sflag [#allocation6], %s260
        %s262 = sand.u32 %s173, 1
        %s263 = smul.addr %s262, 8
        %s264 = scalar_lea.vmem [#allocation5], %s263
        %p265 = scmp.lt.s32.totalorder %s24, 1
        %s266 = scalar_select %p265, %s24, 1
        %p267 = scmp.lt.s32.totalorder %s25, 1
        %s268 = scalar_select %p267, %s25, 1
        %s269 = smul.addr %s266, 2
        %s270 = sadd.s32 %s268, %s269
        %s271 = smul.addr %s270, 2
        %s272 = scalar_lea.vmem %s0, %s271
        %p274 = scmp.eq.s32.totalorder %s25, 0
        // Predicated region
        $region45: #{tpu_custom_call.1} parent=43 // pred_check
          %p275 = pneg %p274
        $region46: #{tpu_custom_call.1} parent=43 // pred_check_branch
          %277 = sbr.rel (%p275) target = $region48
        $region47: #{tpu_custom_call.1} parent=43 // pred_region
          %vm278 = vcmask 7168
          %279 = vst.msk [vmem:[#allocation2] sm:$0xff] %vm278, -inf
          %280 = vst.msk [vmem:[#allocation3] sm:$0xff] %vm278, 0.0
          %vm281 = vcmask 261120
          %282 = vst.msk [vmem:[#allocation4] sm:$0xff] %vm281, 0.0
        $region48: #{tpu_custom_call.1} parent=43 // pred_fallthru
          _
        %v283 = vld [vmem:[%s272] sm:$0x3]
        %v284 = vld [vmem:[%s1] sm:$0xff]
        %v285 = vld [vmem:[%s1 + $0x8] sm:$0xff]
        %v286 = vld [vmem:[%s1 + $0x10] sm:$0xff]
        %v287 = vld [vmem:[%s1 + $0x18] sm:$0xff]
        %v288 = vunpack.c.l.bf16 %v283
        %290 = vset.pattern.permute.xlu0 0
        %291 = vperm.xlu0 %290, %v284
        %v292 = vpop.permute.xlu0 %291
        %295 = vset.pattern.permute.xlu0 0
        %296 = vperm.xlu0 %295, %v285
        %v297 = vpop.permute.xlu0 %296
        %300 = vset.pattern.permute.xlu0 0
        %301 = vperm.xlu0 %300, %v286
        %v302 = vpop.permute.xlu0 %301
        %305 = vset.pattern.permute.xlu0 0
        %306 = vperm.xlu0 %305, %v287
        %v307 = vpop.permute.xlu0 %306
        %v309 = vlaneseq
        %v310 = vshrl.u32 %v309, 7
        %v311 = vsub.s32 0, %v310
        %v312 = vrot.slane %v288, %v311
        %v313 = vmul.f32 %v292, %v312
        %v314 = vmul.f32 %v297, %v312
        %v315 = vmul.f32 %v302, %v312
        %v316 = vmul.f32 %v307, %v312
        %s317 = scalar_lea.vmem %s1, 32
        %v318 = vld [vmem:[%s317] sm:$0xff]
        %v319 = vld [vmem:[%s317 + $0x8] sm:$0xff]
        %v320 = vld [vmem:[%s317 + $0x10] sm:$0xff]
        %v321 = vld [vmem:[%s317 + $0x18] sm:$0xff]
        %323 = vset.pattern.permute.xlu0 0
        %324 = vperm.xlu0 %323, %v318
        %v325 = vpop.permute.xlu0 %324
        %328 = vset.pattern.permute.xlu0 0
        %329 = vperm.xlu0 %328, %v319
        %v330 = vpop.permute.xlu0 %329
        %333 = vset.pattern.permute.xlu0 0
        %334 = vperm.xlu0 %333, %v320
        %v335 = vpop.permute.xlu0 %334
        %338 = vset.pattern.permute.xlu0 0
        %339 = vperm.xlu0 %338, %v321
        %v340 = vpop.permute.xlu0 %339
        %v342 = vlaneseq
        %v343 = vshrl.u32 %v342, 7
        %v344 = vsub.s32 1, %v343
        %v345 = vrot.slane %v288, %v344
        %v346 = vmul.f32 %v325, %v345
        %v347 = vmul.f32 %v330, %v345
        %v348 = vmul.f32 %v335, %v345
        %v349 = vmul.f32 %v340, %v345
        %v350 = vadd.f32 %v313, %v346
        %v351 = vadd.f32 %v314, %v347
        %v352 = vadd.f32 %v315, %v348
        %v353 = vadd.f32 %v316, %v349
        %s354 = scalar_lea.vmem %s1, 64
        %v355 = vld [vmem:[%s354] sm:$0xff]
        %v356 = vld [vmem:[%s354 + $0x8] sm:$0xff]
        %v357 = vld [vmem:[%s354 + $0x10] sm:$0xff]
        %v358 = vld [vmem:[%s354 + $0x18] sm:$0xff]
        %360 = vset.pattern.permute.xlu0 0
        %361 = vperm.xlu0 %360, %v355
        %v362 = vpop.permute.xlu0 %361
        %365 = vset.pattern.permute.xlu0 0
        %366 = vperm.xlu0 %365, %v356
        %v367 = vpop.permute.xlu0 %366
        %370 = vset.pattern.permute.xlu0 0
        %371 = vperm.xlu0 %370, %v357
        %v372 = vpop.permute.xlu0 %371
        %375 = vset.pattern.permute.xlu0 0
        %376 = vperm.xlu0 %375, %v358
        %v377 = vpop.permute.xlu0 %376
        %v379 = vlaneseq
        %v380 = vshrl.u32 %v379, 7
        %v381 = vsub.s32 2, %v380
        %v382 = vrot.slane %v288, %v381
        %v383 = vmul.f32 %v362, %v382
        %v384 = vmul.f32 %v367, %v382
        %v385 = vmul.f32 %v372, %v382
        %v386 = vmul.f32 %v377, %v382
        %v387 = vadd.f32 %v350, %v383
        %v388 = vadd.f32 %v351, %v384
        %v389 = vadd.f32 %v352, %v385
        %v390 = vadd.f32 %v353, %v386
        %v391 = vld [vmem:[%s2] sm:$0xff]
        %v392 = vld [vmem:[%s2 + $0x8] sm:$0xff]
        %v393 = vld [vmem:[%s2 + $0x10] sm:$0xff]
        %v394 = vld [vmem:[%s2 + $0x18] sm:$0xff]
        %396 = vset.pattern.permute.xlu0 0
        %397 = vperm.xlu0 %396, %v391
        %v398 = vpop.permute.xlu0 %397
        %401 = vset.pattern.permute.xlu0 0
        %402 = vperm.xlu0 %401, %v392
        %v403 = vpop.permute.xlu0 %402
        %406 = vset.pattern.permute.xlu0 0
        %407 = vperm.xlu0 %406, %v393
        %v408 = vpop.permute.xlu0 %407
        %411 = vset.pattern.permute.xlu0 0
        %412 = vperm.xlu0 %411, %v394
        %v413 = vpop.permute.xlu0 %412
        %v415 = vadd.f32 %v387, %v398
        %v416 = vadd.f32 %v388, %v403
        %v417 = vadd.f32 %v389, %v408
        %v418 = vadd.f32 %v390, %v413
        %v419 = vmax.f32 %v415, 0.0
        %v420 = vmax.f32 %v416, 0.0
        %v421 = vmax.f32 %v417, 0.0
        %v422 = vmax.f32 %v418, 0.0
        %v423 = vpack.c.bf16 %v420, %v419
        %v424 = vpack.c.bf16 %v422, %v421
        %v425 = vld [vmem:[%s3] sm:$0xf]
        %vm426 = vcmask 261120
        %v428 = vsel %vm426, %v425, 0
        %430 = vmatprep.subr.bf16.mxu0 0
        %431 = vmatpush1.bf16.msra.mxu0 %v423
        %432 = vmatprep.subr.bf16.mxu0 0
        %433 = vmatpush1.bf16.msra.mxu0 %v424
        %434 = vmatprep.subr.bf16.mxu0 0
        %435 = vmatpush1.bf16.msra.mxu0 0
        %436 = vmatprep.subr.bf16.mxu0 0
        %437 = vmatpush1.bf16.msra.mxu0 0
        %438 = vmatprep.subr.bf16.mxu0 0
        %439 = vmatpush1.bf16.msra.mxu0 0
        %440 = vmatprep.subr.bf16.mxu0 0
        %441 = vmatpush1.bf16.msra.mxu0 0
        %442 = vmatprep.subr.bf16.mxu0 0
        %443 = vmatpush1.bf16.msra.mxu0 0
        %444 = vmatprep.subr.bf16.mxu0 0
        %445 = vmatpush1.bf16.msra.mxu0 0
        %446 = vmatprep.subr.bf16.mxu0 0
        %447 = vmatpush1.bf16.msra.mxu0 0
        %448 = vmatprep.subr.bf16.mxu0 0
        %449 = vmatpush1.bf16.msra.mxu0 0
        %450 = vmatprep.subr.bf16.mxu0 0
        %451 = vmatpush1.bf16.msra.mxu0 0
        %452 = vmatprep.subr.bf16.mxu0 0
        %453 = vmatpush1.bf16.msra.mxu0 0
        %454 = vmatprep.subr.bf16.mxu0 0
        %455 = vmatpush1.bf16.msra.mxu0 0
        %456 = vmatprep.subr.bf16.mxu0 0
        %457 = vmatpush1.bf16.msra.mxu0 0
        %458 = vmatprep.subr.bf16.mxu0 0
        %459 = vmatpush1.bf16.msra.mxu0 0
        %460 = vmatprep.subr.bf16.mxu0 0
        %461 = vmatpush1.bf16.msra.mxu0 0
        %462 = vmatprep.mubr.bf16.mxu0 0
        %463 = vmatmul.mubr.bf16.gmra.mrb[0].mxu0 %v428
        %v464 = vpop.f32.mrb[0].mxu0
        %v465 = vadd.f32 0.0, %v464
        %v466 = vpop.f32.mrb[0].mxu0
        %v467 = vpop.f32.mrb[0].mxu0
        %v468 = vpop.f32.mrb[0].mxu0
        %469 = vdwg.mxu0
        %v470 = vld [vmem:[#allocation2] sm:$0xff]
        %471 = vmax.xlane.f32.xlu0 %v465
        %v472 = vpop.xlane.xlu0 %471
        %v473 = vmax.f32 %v470, %v472
        %v474 = vsub.f32 %v470, %v473
        %v475 = vmul.f32 %v474, 1.442695
        %v476 = vpow.pop %v475
        %478 = vset.pattern.permute.xlu0 0
        %479 = vperm.xlu0 %478, %v473
        %v480 = vpop.permute.xlu0 %479
        %v482 = vsub.f32 %v465, %v480
        %v483 = vmul.f32 %v482, 1.442695
        %v484 = vpow.pop %v483
        %v485 = vld [vmem:[#allocation3] sm:$0xff]
        %v486 = vmul.f32 %v476, %v485
        %487 = vadd.xlane.f32.xlu0 %v484
        %v488 = vpop.xlane.xlu0 %487
        %v489 = vadd.f32 %v486, %v488
        %vm490 = vcmask 7168
        %491 = vst.msk [vmem:[#allocation3] sm:$0xff] %vm490, %v489
        %v492 = vpack.c.bf16 %v484, %v484
        %493 = vmatprep.subr.bf16.mxu0 0
        %494 = vmatpush1.bf16.xpose.msra.mxu0 %v423
        %495 = vmatprep.subr.bf16.mxu0 0
        %496 = vmatpush1.bf16.xpose.msra.mxu0 %v424
        %497 = vmatprep.subr.bf16.mxu0 0
        %498 = vmatpush1.bf16.xpose.msra.mxu0 0
        %499 = vmatprep.subr.bf16.mxu0 0
        %500 = vmatpush1.bf16.xpose.msra.mxu0 0
        %501 = vmatprep.subr.bf16.mxu0 0
        %502 = vmatpush1.bf16.xpose.msra.mxu0 0
        %503 = vmatprep.subr.bf16.mxu0 0
        %504 = vmatpush1.bf16.xpose.msra.mxu0 0
        %505 = vmatprep.subr.bf16.mxu0 0
        %506 = vmatpush1.bf16.xpose.msra.mxu0 0
        %507 = vmatprep.subr.bf16.mxu0 0
        %508 = vmatpush1.bf16.xpose.msra.mxu0 0
        %509 = vmatprep.subr.bf16.mxu0 0
        %510 = vmatpush1.bf16.xpose.msra.mxu0 0
        %511 = vmatprep.subr.bf16.mxu0 0
        %512 = vmatpush1.bf16.xpose.msra.mxu0 0
        %513 = vmatprep.subr.bf16.mxu0 0
        %514 = vmatpush1.bf16.xpose.msra.mxu0 0
        %515 = vmatprep.subr.bf16.mxu0 0
        %516 = vmatpush1.bf16.xpose.msra.mxu0 0
        %517 = vmatprep.subr.bf16.mxu0 0
        %518 = vmatpush1.bf16.xpose.msra.mxu0 0
        %519 = vmatprep.subr.bf16.mxu0 0
        %520 = vmatpush1.bf16.xpose.msra.mxu0 0
        %521 = vmatprep.subr.bf16.mxu0 0
        %522 = vmatpush1.bf16.xpose.msra.mxu0 0
        %523 = vmatprep.subr.bf16.mxu0 0
        %524 = vmatpush1.bf16.xpose.msra.mxu0 0
        %525 = vmatprep.mubr.bf16.mxu0 0
        %526 = vmatmul.mubr.bf16.gmra.mrb[0].mxu0 %v492
        %v527 = vpop.f32.mrb[0].mxu0
        %v528 = vadd.f32 0.0, %v527
        %v529 = vpop.f32.mrb[0].mxu0
        %v530 = vpop.f32.mrb[0].mxu0
        %v531 = vpop.f32.mrb[0].mxu0
        %532 = vdwg.mxu0
        %v533 = vld [vmem:[#allocation4] sm:$0xff]
        %535 = vset.pattern.permute.xlu0 0
        %536 = vperm.xlu0 %535, %v476
        %v537 = vpop.permute.xlu0 %536
        %v539 = vmul.f32 %v537, %v533
        %v540 = vadd.f32 %v539, %v528
        %541 = vst.msk [vmem:[#allocation4] sm:$0xff] %vm426, %v540
        %542 = vst.msk [vmem:[#allocation2] sm:$0xff] %vm490, %v473
        %p543 = scmp.eq.s32.totalorder %s25, 1
        // Predicated region
        $region49: #{tpu_custom_call.1} parent=43 // pred_check
          %p544 = pneg %p543
        $region50: #{tpu_custom_call.1} parent=43 // pred_check_branch
          %546 = sbr.rel (%p544) target = $region52
        $region51: #{tpu_custom_call.1} parent=43 // pred_region
          %v547 = vld [vmem:[#allocation4] sm:$0xff]
          %v548 = vld [vmem:[#allocation3] sm:$0xff]
          %550 = vset.pattern.permute.xlu0 0
          %551 = vperm.xlu0 %550, %v548
          %v552 = vpop.permute.xlu0 %551
          %v554 = vrcp.pop %v552
          %v555 = vmul.f32 %v547, %v554
          %v556 = vpack.c.bf16 %v555, %v555
          %v557 = vld [vmem:[%s4] sm:$0xf]
          %v558 = vld [vmem:[%s4 + $0x4] sm:$0xf]
          %v559 = vld [vmem:[%s4 + $0x8] sm:$0xf]
          %v560 = vld [vmem:[%s4 + $0xc] sm:$0xf]
          %v561 = vld [vmem:[%s5] sm:$0x1]
          %v563 = vlaneseq
          %v564 = vshrl.u32 %v563, 7
          %v565 = vsub.s32 0, %v564
          %v566 = vrot.slane %v561, %v565
          %v572 = vunpack.c.l.b16 %v557
          %v573 = vunpack.c.l.b16 %v558
          %v574 = vunpack.c.l.b16 %v559
          %v575 = vunpack.c.l.b16 %v560
          %v576 = vpack.c.b16 %v573, %v572
          %v577 = vpack.c.b16 %v575, %v574
          %v581 = vsel %vm426, %v556, 0
          %583 = vmatprep.subr.bf16.mxu0 0
          %584 = vmatpush1.bf16.msra.mxu0 %v576
          %585 = vmatprep.subr.bf16.mxu0 0
          %586 = vmatpush1.bf16.msra.mxu0 %v577
          %587 = vmatprep.subr.bf16.mxu0 0
          %588 = vmatpush1.bf16.msra.mxu0 0
          %589 = vmatprep.subr.bf16.mxu0 0
          %590 = vmatpush1.bf16.msra.mxu0 0
          %591 = vmatprep.subr.bf16.mxu0 0
          %592 = vmatpush1.bf16.msra.mxu0 0
          %593 = vmatprep.subr.bf16.mxu0 0
          %594 = vmatpush1.bf16.msra.mxu0 0
          %595 = vmatprep.subr.bf16.mxu0 0
          %596 = vmatpush1.bf16.msra.mxu0 0
          %597 = vmatprep.subr.bf16.mxu0 0
          %598 = vmatpush1.bf16.msra.mxu0 0
          %599 = vmatprep.subr.bf16.mxu0 0
          %600 = vmatpush1.bf16.msra.mxu0 0
          %601 = vmatprep.subr.bf16.mxu0 0
          %602 = vmatpush1.bf16.msra.mxu0 0
          %603 = vmatprep.subr.bf16.mxu0 0
          %604 = vmatpush1.bf16.msra.mxu0 0
          %605 = vmatprep.subr.bf16.mxu0 0
          %606 = vmatpush1.bf16.msra.mxu0 0
          %607 = vmatprep.subr.bf16.mxu0 0
          %608 = vmatpush1.bf16.msra.mxu0 0
          %609 = vmatprep.subr.bf16.mxu0 0
          %610 = vmatpush1.bf16.msra.mxu0 0
          %611 = vmatprep.subr.bf16.mxu0 0
          %612 = vmatpush1.bf16.msra.mxu0 0
          %613 = vmatprep.subr.bf16.mxu0 0
          %614 = vmatpush1.bf16.msra.mxu0 0
          %615 = vmatprep.mubr.bf16.mxu0 0
          %616 = vmatmul.mubr.bf16.gmra.mrb[0].mxu0 %v581
          %v617 = vpop.f32.mrb[0].mxu0
          %v618 = vadd.f32 %v566, %v617
          %v619 = vpop.f32.mrb[0].mxu0
          %v620 = vpop.f32.mrb[0].mxu0
          %v621 = vpop.f32.mrb[0].mxu0
          %622 = vdwg.mxu0
          %v623 = vxor.u32 %v618, 2147483648
          %v624 = vmul.f32 %v623, 1.442695
          %v625 = vpow.pop %v624
          %v626 = vadd.f32 %v625, 1.0
          %v627 = vrcp.pop %v626
          %v628 = vmul.f32 1.0, %v627
          %629 = vst [vmem:[%s264] sm:$0xff] %v628
        $region52: #{tpu_custom_call.1} parent=43 // pred_fallthru
          _
        %s630 = sand.u32 %s173, 1
        %s631 = scalar_lea.sflag [#allocation6], %s630
        %s632 = sand.u32 %s173, 1
        %s633 = smul.addr %s632, 8
        %s634 = scalar_lea.vmem [#allocation5], %s633
        // Predicated region
        $region53: #{tpu_custom_call.1} parent=43 // pred_check
          %p635 = pneg %p183
        $region54: #{tpu_custom_call.1} parent=43 // pred_check_branch
          %637 = sbr.rel (%p635) target = $region56
        $region55: #{tpu_custom_call.1} parent=43 // pred_region
          %s639 = ssub.s32 128, 128
          %640 = vsyncadd %s631, %s639
          %s641 = smul.addr %s24, 128
          %s642 = scalar_lea.hbm %s6, %s641
          %s644 = sshll.u32 %s634, 4
          %s645 = int_to_ptr.vmem [resolvable:$true] %s644
          %647 = dma.vmem_to_hbm [thread:$0]  %s645, 128, %s642, %s631
        $region56: #{tpu_custom_call.1} parent=43 // pred_fallthru
          _
      $region44: #{tpu_custom_call.1} parent=5 // pred_fallthru
        _
      %p648 = scmp.le.s32.totalorder 2, %s15
      // Predicated region
      $region57: #{tpu_custom_call.1} parent=5 // pred_check
        %p649 = pneg %p648
      $region58: #{tpu_custom_call.1} parent=5 // pred_check_branch
        %651 = sbr.rel (%p649) target = $region60
      $region59: #{tpu_custom_call.1} parent=5 // pred_region
        %s652 = ssub.s32 %s15, 2
        // Predicated region
        $region61: #{tpu_custom_call.1} parent=59 // pred_check
          %p653 = pneg %p189
        $region62: #{tpu_custom_call.1} parent=59 // pred_check_branch
          %655 = sbr.rel (%p653) target = $region64
        $region63: #{tpu_custom_call.1} parent=59 // pred_region
          %s656 = sand.u32 %s174, 1
          %s657 = scalar_lea.sflag [#allocation6], %s656
          %s658 = sand.u32 %s174, 1
          %s659 = smul.addr %s658, 8
          %s660 = scalar_lea.vmem [#allocation5], %s659
          %661 = dma.done %s657, 128
        $region64: #{tpu_custom_call.1} parent=59 // pred_fallthru
          _
      $region60: #{tpu_custom_call.1} parent=5 // pred_fallthru
        _
    $region6: #{tpu_custom_call.1} parent=1 // loop_footer
      %s19 = sadd.s32 1, %s15
    $region7: #{tpu_custom_call.1} parent=1 // loop_footer_branch
      %14 = sbr.rel target = $region3
    $region8: #{tpu_custom_call.1} parent=1 // loop_exit
      _
    %662 = vsyncpa [#allocation6], 1
    %s663 = scalar_lea.sflag [#allocation6], 1
    %664 = vsyncpa %s663, 1

</llo_original>
